<compile_context>
chip_gen: v7x
topology: tpu7x:2x2x1
jax: 0.10.0
libtpu: 0.0.40
codegen_flags: <defaults>
</compile_context>

<pallas_src>
import functools

import jax
import jax.numpy as jnp
from jax.experimental import pallas as pl
from jax.experimental.pallas import tpu as pltpu


def _layernorm_kernel(x_ref, w_ref, b_ref, o_ref, *, eps, inv_d):
    x = x_ref[...].astype(jnp.float32)                  # (tile_rows, D)
    # Fused single-pass statistics (one load of x, two XLU reductions).
    s1 = jnp.sum(x, axis=-1, keepdims=True)             # (tile_rows, 1)
    s2 = jnp.sum(x * x, axis=-1, keepdims=True)         # (tile_rows, 1)
    mean = s1 * inv_d
    var = jnp.maximum(s2 * inv_d - mean * mean, 0.0)    # clamp: no negative var
    inv = jax.lax.rsqrt(var + eps)
    w = w_ref[...]                                       # (1, D), already f32
    b = b_ref[...]                                       # (1, D), already f32
    o_ref[...] = ((x - mean) * inv * w + b).astype(o_ref.dtype)


def _vmem_capacity_bytes():
    try:
        return int(pltpu.get_tpu_info().vmem_capacity_bytes)
    except Exception:
        return 128 << 20  # v5e / v6e physical VMEM


def _round_up(x, m):
    return ((x + m - 1) // m) * m


def _pick_tile_rows(R, D, in_itemsize, out_itemsize):
    """Pick a sublane-aligned row tile sized for the HBM roofline."""
    vmem_cap = _vmem_capacity_bytes()
    Dp = _round_up(D, 128)  # VMEM lane padding (layout only, not HBM traffic)

    # HBM bytes per block row governed by the larger of the in/out dtypes.
    row_hbm_bytes = D * max(in_itemsize, out_itemsize)
    # ~6 MiB blocks on 128-MiB-VMEM parts (v5e/v6e), ~4 MiB on v7x (64 MiB/TC).
    target_block_bytes = (6 << 20) if vmem_cap >= (96 << 20) else (4 << 20)
    tile = max(1, target_block_bytes // max(row_hbm_bytes, 1))

    # Check the f32 working set + double buffers against the VMEM budget.
    per_row_vmem = 2 * Dp * (in_itemsize + out_itemsize) + 2 * Dp * 4
    vmem_budget = min(vmem_cap * 3 // 4, 48 << 20) - (4 << 20)
    tile = min(tile, max(1, vmem_budget // max(per_row_vmem, 1)))

    # Dtype-native sublane multiple for unmasked output stores.
    sub = max(8, 32 // max(out_itemsize, 1))

    # Keep >= ~8 grid steps (>= 4 per v7x TensorCore) when there is enough work,
    # so double-buffering hides DMA on both cores.
    if R > 8 * sub:
        cap = _round_up(pl.cdiv(R, 8), sub)
        tile = min(tile, cap)

    tile = max(sub, (tile // sub) * sub)            # sublane-aligned
    tile = min(tile, _round_up(R, sub))             # never bigger than needed
    return max(sub, tile), vmem_cap


def layer_norm(x, weight, bias, eps=1e-5, tile_rows=None):
    """x: (..., D). weight, bias: (D,). Returns same shape/dtype as x."""
    orig_shape = x.shape
    D = orig_shape[-1]
    x2 = x.reshape(-1, D)
    R = x2.shape[0]

    in_itemsize = jnp.dtype(x2.dtype).itemsize
    out_itemsize = jnp.dtype(x.dtype).itemsize

    if tile_rows is None:
        tile_rows, vmem_cap = _pick_tile_rows(R, D, in_itemsize, out_itemsize)
    else:
        vmem_cap = _vmem_capacity_bytes()
        sub = max(8, 32 // max(out_itemsize, 1))
        tile_rows = max(sub, (int(tile_rows) // sub) * sub)

    # Cast params to f32 once in the wrapper (no per-tile casts in the kernel).
    w2 = weight.astype(jnp.float32).reshape(1, D)
    b2 = bias.astype(jnp.float32).reshape(1, D)

    # VMEM budget: double-buffered x/out blocks + params + ~2 f32 temps + slack.
    Dp = _round_up(D, 128)
    blk_in = tile_rows * Dp * in_itemsize
    blk_out = tile_rows * Dp * out_itemsize
    blk_f32 = tile_rows * Dp * 4
    vmem_limit = 2 * (blk_in + blk_out) + 2 * blk_f32 + 2 * (2 * Dp * 4) + (4 << 20)
    vmem_limit = max(vmem_limit, 32 << 20)
    vmem_limit = min(vmem_limit, min(vmem_cap * 3 // 4, 48 << 20))

    # cdiv grid over the UNPADDED array: the ragged edge block is masked by
    # Pallas on the row axis (safe: LayerNorm is purely row-wise). The lane
    # axis uses the full extent D, so no garbage ever feeds the reduction.
    grid = (pl.cdiv(R, tile_rows),)
    out = pl.pallas_call(
        functools.partial(_layernorm_kernel, eps=float(eps), inv_d=1.0 / float(D)),
        out_shape=jax.ShapeDtypeStruct((R, D), x.dtype),
        grid_spec=pl.GridSpec(
            grid=grid,
            in_specs=[
                pl.BlockSpec((tile_rows, D), lambda i: (i, 0)),
                pl.BlockSpec((1, D), lambda i: (0, 0)),
                pl.BlockSpec((1, D), lambda i: (0, 0)),
            ],
            out_specs=pl.BlockSpec((tile_rows, D), lambda i: (i, 0)),
        ),
        compiler_params=pltpu.CompilerParams(
            dimension_semantics=("parallel",),
            vmem_limit_bytes=int(vmem_limit),
        ),
    )(x2, w2, b2)

    return out.reshape(orig_shape)


if __name__ == "__main__":
    key = jax.random.PRNGKey(0)
    batch, seq, hidden = 2, 8, 32

    x = jax.random.normal(key, (batch, seq, hidden), dtype=jnp.float32)

    # nn.LayerNorm default init: weight = ones, bias = zeros.
    weight = jnp.ones((hidden,), dtype=jnp.float32)
    bias = jnp.zeros((hidden,), dtype=jnp.float32)

    y = layer_norm(x, weight, bias, eps=1e-5)
    y = jax.block_until_ready(y)

    # Reference check in plain JAX (same math as the PyTorch forward).
    mean = jnp.mean(x, axis=-1, keepdims=True)
    var = jnp.mean((x - mean) ** 2, axis=-1, keepdims=True)
    ref = (x - mean) / jnp.sqrt(var + 1e-5) * weight + bias
    assert jnp.allclose(y, ref, atol=1e-5, rtol=1e-5), "mismatch vs reference"

    print("KERNEL_OK")
</pallas_src>

<mosaic_0001>
module attributes {stable_mosaic.version = 11 : i64} {
  func.func @_layernorm_kernel(%arg0: i32, %arg1: memref<16x32xf32, #tpu.memory_space<vmem>>, %arg2: memref<1x32xf32, #tpu.memory_space<vmem>>, %arg3: memref<1x32xf32, #tpu.memory_space<vmem>>, %arg4: memref<16x32xf32, #tpu.memory_space<vmem>>) attributes {dimension_semantics = [#tpu.dimension_semantics<parallel>], iteration_bounds = array<i64: 1>, scalar_prefetch = 0 : i64, scratch_operands = 0 : i64, tpu.core_type = #tpu.core_type<tc>, window_params = [{transform_indices = @transform_0, window_bounds = array<i64: 16, 32>}, {pipeline_mode = #tpu.pipeline_mode<synchronous>, transform_indices = @transform_1, window_bounds = array<i64: 1, 32>}, {pipeline_mode = #tpu.pipeline_mode<synchronous>, transform_indices = @transform_2, window_bounds = array<i64: 1, 32>}, {transform_indices = @transform_3, window_bounds = array<i64: 16, 32>}]} {
    %c0 = arith.constant 0 : index
    %c0_0 = arith.constant 0 : index
    %0 = vector.load %arg1[%c0, %c0_0] : memref<16x32xf32, #tpu.memory_space<vmem>>, vector<16x32xf32>
    %cst = arith.constant dense<0.000000e+00> : vector<16xf32>
    %1 = vector.multi_reduction <add>, %0, %cst [1] : vector<16x32xf32> to vector<16xf32>
    %2 = vector.shape_cast %1 : vector<16xf32> to vector<16x1xf32>
    %3 = arith.mulf %0, %0 : vector<16x32xf32>
    %cst_1 = arith.constant dense<0.000000e+00> : vector<16xf32>
    %4 = vector.multi_reduction <add>, %3, %cst_1 [1] : vector<16x32xf32> to vector<16xf32>
    %5 = vector.shape_cast %4 : vector<16xf32> to vector<16x1xf32>
    %cst_2 = arith.constant 3.125000e-02 : f32
    %6 = vector.broadcast %cst_2 : f32 to vector<16x1xf32>
    %7 = arith.mulf %2, %6 : vector<16x1xf32>
    %cst_3 = arith.constant 3.125000e-02 : f32
    %8 = vector.broadcast %cst_3 : f32 to vector<16x1xf32>
    %9 = arith.mulf %5, %8 : vector<16x1xf32>
    %10 = arith.mulf %7, %7 : vector<16x1xf32>
    %11 = arith.subf %9, %10 : vector<16x1xf32>
    %cst_4 = arith.constant 0.000000e+00 : f32
    %12 = vector.broadcast %cst_4 : f32 to vector<16x1xf32>
    %13 = arith.maximumf %11, %12 : vector<16x1xf32>
    %cst_5 = arith.constant 9.99999974E-6 : f32
    %14 = vector.broadcast %cst_5 : f32 to vector<16x1xf32>
    %15 = arith.addf %13, %14 : vector<16x1xf32>
    %16 = math.rsqrt %15 : vector<16x1xf32>
    %c0_6 = arith.constant 0 : index
    %c0_7 = arith.constant 0 : index
    %17 = vector.load %arg2[%c0_6, %c0_7] : memref<1x32xf32, #tpu.memory_space<vmem>>, vector<1x32xf32>
    %c0_8 = arith.constant 0 : index
    %c0_9 = arith.constant 0 : index
    %18 = vector.load %arg3[%c0_8, %c0_9] : memref<1x32xf32, #tpu.memory_space<vmem>>, vector<1x32xf32>
    %19 = vector.broadcast %7 : vector<16x1xf32> to vector<16x32xf32>
    %20 = arith.subf %0, %19 : vector<16x32xf32>
    %21 = vector.broadcast %16 : vector<16x1xf32> to vector<16x32xf32>
    %22 = arith.mulf %20, %21 : vector<16x32xf32>
    %23 = vector.broadcast %17 : vector<1x32xf32> to vector<16x32xf32>
    %24 = arith.mulf %22, %23 : vector<16x32xf32>
    %25 = vector.broadcast %18 : vector<1x32xf32> to vector<16x32xf32>
    %26 = arith.addf %24, %25 : vector<16x32xf32>
    %c0_10 = arith.constant 0 : index
    %c0_11 = arith.constant 0 : index
    %27 = vector.load %arg4[%c0_10, %c0_11] : memref<16x32xf32, #tpu.memory_space<vmem>>, vector<16x32xf32>
    tpu.vector_store %arg4[%c0_10, %c0_11], %26 {strides = array<i32>} : memref<16x32xf32, #tpu.memory_space<vmem>>, vector<16x32xf32>,
    return
  }
  func.func @transform_0(%arg0: i32) -> (i32, i32) {
    %c0_i32 = arith.constant 0 : i32
    %c0_i32_0 = arith.constant 0 : i32
    return %arg0, %c0_i32 : i32, i32
  }
  func.func @transform_1(%arg0: i32) -> (i32, i32) {
    %c0_i32 = arith.constant 0 : i32
    %c0_i32_0 = arith.constant 0 : i32
    %c0_i32_1 = arith.constant 0 : i32
    return %c0_i32, %c0_i32_0 : i32, i32
  }
  func.func @transform_2(%arg0: i32) -> (i32, i32) {
    %c0_i32 = arith.constant 0 : i32
    %c0_i32_0 = arith.constant 0 : i32
    %c0_i32_1 = arith.constant 0 : i32
    return %c0_i32, %c0_i32_0 : i32, i32
  }
  func.func @transform_3(%arg0: i32) -> (i32, i32) {
    %c0_i32 = arith.constant 0 : i32
    %c0_i32_0 = arith.constant 0 : i32
    return %arg0, %c0_i32 : i32, i32
  }
}

</mosaic_0001>

<llo_original>
// kernel: tpu_custom_call.1
$region0: #{tpu_custom_call.1}
  #allocation0 [shape = 'u32[]', space=smem, size = 0x4, offset = 0x4, fixed_abs, tag = 'smem constant byte address 0x4 - core index']
  #allocation1 [shape = 'u32[144,128]{1,0:T(1,128)}', space=vmem, size = 0x12000, scoped, tag = 'internal scratch']
  %s0 = inlined_call_operand.hbm [shape: f32[16,32], index: 0, kind: input, shape index: {}]
  %s1 = inlined_call_operand.vmem [shape: f32[1,32], index: 1, kind: input, shape index: {}]
  %s2 = inlined_call_operand.vmem [shape: f32[1,32], index: 2, kind: input, shape index: {}]
  %s3 = inlined_call_operand.hbm [shape: f32[16,32], index: 3, kind: output, shape index: {}]
  %s4 = sld [smem:[#allocation0]]
  $region26: #{tpu_custom_call.1} parent=0
    _
  %s6 = ssub.s32 1, %s4
  %s7 = scalar_select 0, %s6, %s4
  $region1: #{tpu_custom_call.1} parent=0
    #allocation2 [shape = 'u8[8192]{0}', space=vmem, size = 0x2000, scoped, tag = 'input window, operand 0, single buffered']
    #allocation3 [shape = 's32[1]{0}', space=sflag, size = 0x4, scoped, tag = 'scoped memory for tpu_custom_call.1']
    #allocation4 [shape = 's32[1]{0}', space=sflag, size = 0x4, scoped, tag = 'scoped memory for tpu_custom_call.1']
    #allocation5 [shape = 'u8[8192]{0}', space=vmem, size = 0x2000, scoped, tag = 'output window, operand 0, single buffered']
    %8 = vsyncpa [#allocation3], 0
    %9 = vsyncpa [#allocation4], 0
    // Predicated region
    $region2: #{tpu_custom_call.1} parent=1 // pred_check
      _
    $region3: #{tpu_custom_call.1} parent=1 // pred_check_branch
      %11 = sbr.rel (0) target = $region5
    $region4: #{tpu_custom_call.1} parent=1 // pred_region
      %s13 = ssub.s32 256, 256
      %14 = vsyncadd [#allocation3], %s13
      %s15 = sshll.u32 [#allocation2], 4
      %s16 = int_to_ptr.vmem [resolvable:$true] %s15
      %21 = dma.hbm_to_vmem [thread:$0]  %s0, 256, %s16, [#allocation3], 128, 128, 8
    $region5: #{tpu_custom_call.1} parent=1 // pred_fallthru
      _
    // Predicated region
    $region6: #{tpu_custom_call.1} parent=1 // pred_check
      _
    $region7: #{tpu_custom_call.1} parent=1 // pred_check_branch
      %23 = sbr.rel (0) target = $region9
    $region8: #{tpu_custom_call.1} parent=1 // pred_region
      _
    $region9: #{tpu_custom_call.1} parent=1 // pred_fallthru
      _
    // Predicated region
    $region10: #{tpu_custom_call.1} parent=1 // pred_check
      _
    $region11: #{tpu_custom_call.1} parent=1 // pred_check_branch
      %25 = sbr.rel (0) target = $region13
    $region12: #{tpu_custom_call.1} parent=1 // pred_region
      _
    $region13: #{tpu_custom_call.1} parent=1 // pred_fallthru
      _
    // Predicated region
    $region14: #{tpu_custom_call.1} parent=1 // pred_check
      _
    $region15: #{tpu_custom_call.1} parent=1 // pred_check_branch
      %27 = sbr.rel (0) target = $region17
    $region16: #{tpu_custom_call.1} parent=1 // pred_region
      %28 = dma.done [#allocation3], 256
    $region17: #{tpu_custom_call.1} parent=1 // pred_fallthru
      _
    %v29 = vld [vmem:[#allocation2] sm:$0xff]
    %v30 = vld [vmem:[#allocation2 + $0x8] sm:$0xff]
    %vm31 = vcmask 261120
    %v32 = vsel %vm31, %v29, 0.0
    %33 = vadd.xlane.f32.xlu0 %v32
    %v34 = vpop.xlane.xlu0 %33
    %v35 = vsel %vm31, %v30, 0.0
    %36 = vadd.xlane.f32.xlu0 %v35
    %v37 = vpop.xlane.xlu0 %36
    %v38 = vmul.f32 %v29, %v29
    %v39 = vmul.f32 %v30, %v30
    %v40 = vsel %vm31, %v38, 0.0
    %41 = vadd.xlane.f32.xlu0 %v40
    %v42 = vpop.xlane.xlu0 %41
    %v43 = vsel %vm31, %v39, 0.0
    %44 = vadd.xlane.f32.xlu0 %v43
    %v45 = vpop.xlane.xlu0 %44
    %v46 = vmul.f32 %v34, 0.03125
    %v47 = vmul.f32 %v37, 0.03125
    %v48 = vmul.f32 %v42, 0.03125
    %v49 = vmul.f32 %v45, 0.03125
    %v50 = vmul.f32 %v46, %v46
    %v51 = vmul.f32 %v47, %v47
    %v52 = vsub.f32 %v48, %v50
    %v53 = vsub.f32 %v49, %v51
    %v54 = vmax.f32 %v52, 0.0
    %v55 = vmax.f32 %v53, 0.0
    %v56 = vadd.f32 %v54, 1e-05
    %v57 = vadd.f32 %v55, 1e-05
    %v58 = vrsqrt.pop %v56
    %v59 = vrsqrt.pop %v57
    %v60 = vld [vmem:[%s1] sm:$0x1]
    %v61 = vld [vmem:[%s2] sm:$0x1]
    %v62 = vsub.f32 %v29, %v46
    %v63 = vsub.f32 %v30, %v47
    %v64 = vmul.f32 %v62, %v58
    %v65 = vmul.f32 %v63, %v59
    %v67 = vlaneseq
    %v68 = vshrl.u32 %v67, 7
    %v69 = vsub.s32 0, %v68
    %v70 = vrot.slane %v60, %v69
    %v72 = vmul.f32 %v64, %v70
    %v73 = vmul.f32 %v65, %v70
    %v75 = vlaneseq
    %v76 = vshrl.u32 %v75, 7
    %v77 = vsub.s32 0, %v76
    %v78 = vrot.slane %v61, %v77
    %v80 = vadd.f32 %v72, %v78
    %v81 = vadd.f32 %v73, %v78
    %82 = vst.msk [vmem:[#allocation5] sm:$0xff] %vm31, %v80
    %83 = vst.msk [vmem:[#allocation5 + $0x8] sm:$0xff] %vm31, %v81
    // Predicated region
    $region18: #{tpu_custom_call.1} parent=1 // pred_check
      _
    $region19: #{tpu_custom_call.1} parent=1 // pred_check_branch
      %85 = sbr.rel (0) target = $region21
    $region20: #{tpu_custom_call.1} parent=1 // pred_region
      %s87 = ssub.s32 256, 256
      %88 = vsyncadd [#allocation4], %s87
      %s89 = sshll.u32 [#allocation5], 4
      %s90 = int_to_ptr.vmem [resolvable:$true] %s89
      %95 = dma.vmem_to_hbm [thread:$0]  %s90, 256, %s3, [#allocation4], 128, 128, 8
    $region21: #{tpu_custom_call.1} parent=1 // pred_fallthru
      _
    // Predicated region
    $region22: #{tpu_custom_call.1} parent=1 // pred_check
      _
    $region23: #{tpu_custom_call.1} parent=1 // pred_check_branch
      %97 = sbr.rel (0) target = $region25
    $region24: #{tpu_custom_call.1} parent=1 // pred_region
      %98 = dma.done [#allocation4], 256
    $region25: #{tpu_custom_call.1} parent=1 // pred_fallthru
      _
    %99 = vsyncpa [#allocation3], 1
    %100 = vsyncpa [#allocation4], 1

</llo_original>
